<compile_context>
chip_gen: v7x
topology: tpu7x:2x2x1
jax: 0.10.0
libtpu: 0.0.40
codegen_flags: <defaults>
</compile_context>

<pallas_src>
import jax
import jax.numpy as jnp
from jax.experimental import pallas as pl
from jax.experimental.pallas import tpu as pltpu

FEATURES_DIM = 2


# --------------------------------------------------------------------------
# Kernel 1: per-source score, weight gather (MXU), max / argmax over K.
# Tiled over n_src; every tile is independent ("parallel").
# --------------------------------------------------------------------------
def _src_kernel(weights_ref,   # (1, n_dst)        f32  VMEM
                feat_ref,      # (F, tile_s)       f32  VMEM (features transposed)
                lin_w_ref,     # (1, F)            f32  SMEM (scalars)
                cand_ref,      # (K, tile_s)       i32  VMEM (candidates transposed)
                src_val_ref,   # (1, tile_s)       f32  out
                src_node_ref): # (1, tile_s)       i32  out
    f_dim, ts = feat_ref.shape
    k = cand_ref.shape[0]
    n_dst = weights_ref.shape[1]

    # nn.Linear(F, 1, bias=False): score[s] = sum_f feat[s, f] * lin_w[0, f]
    # F == 2, so two scalar-broadcast FMAs (weights read from SMEM) — no lane reduce.
    score = feat_ref[0:1, :] * lin_w_ref[0, 0]                       # (1, ts)
    for fi in range(1, f_dim):
        score = score + feat_ref[fi:fi + 1, :] * lin_w_ref[0, fi]

    w_row = weights_ref[...]                                          # (1, n_dst)
    d_iota = jax.lax.broadcasted_iota(jnp.int32, (n_dst, ts), 0)      # hoisted

    # Gather weights[cand[j, s]] via one-hot MXU matmuls; keep a running
    # strict-greater max so the tie-break matches argmax's first occurrence.
    best_val = None
    best_node = None
    for j in range(k):                                                # K is small & static
        cand_j = cand_ref[j:j + 1, :]                                 # (1, ts) i32
        onehot = (d_iota == cand_j).astype(jnp.float32)               # (n_dst, ts)
        g_j = jnp.dot(w_row, onehot,
                      preferred_element_type=jnp.float32)             # (1, ts) == weights[cand_j]
        v_j = g_j * score                                             # weights_of_source * Linear(feat)
        if j == 0:
            best_val, best_node = v_j, cand_j
        else:
            take = v_j > best_val                                     # strict > keeps first occurrence
            best_val = jnp.where(take, v_j, best_val)
            best_node = jnp.where(take, cand_j, best_node)

    src_val_ref[...] = best_val
    src_node_ref[...] = best_node


# --------------------------------------------------------------------------
# Kernel 2: per-bag max over the bag's source values (BAGS branch max_weights).
# Each (bag, slot) hits exactly one source, so gather == one-hot matmul.
# --------------------------------------------------------------------------
def _bag_kernel(bags_ref,     # (B, tile_b)  i32  VMEM (bags transposed)
                src_val_ref,  # (1, n_src)   f32  VMEM (all per-source maxima)
                bag_max_ref): # (1, tile_b)  f32  out
    b, tb = bags_ref.shape
    n_src = src_val_ref.shape[1]

    sv = src_val_ref[...]                                             # (1, n_src)
    s_iota = jax.lax.broadcasted_iota(jnp.int32, (n_src, tb), 0)      # hoisted

    best = None
    for j in range(b):                                                # B is small & static
        onehot = (s_iota == bags_ref[j:j + 1, :]).astype(jnp.float32) # (n_src, tb)
        v_j = jnp.dot(sv, onehot, preferred_element_type=jnp.float32) # (1, tb) == src_val[bags[j]]
        best = v_j if best is None else jnp.maximum(best, v_j)

    bag_max_ref[...] = best


def _pick_tile(n, cap=256):
    """Largest tile <= cap that evenly divides n (falls back to one tile).

    cap=256 keeps the per-tile one-hot (n_dst * tile * 4B) comfortably inside
    the smaller 64 MiB VMEM of v7x; v5e/v6e (128 MiB) could take ~2x.
    """
    if n <= cap:
        return n
    for t in (cap, 128):
        if n % t == 0:
            return t
    return n


def output_layer(weights, feat, lin_w, cand, bags, *, tile_s=None, tile_b=None):
    n_dst = weights.shape[0]
    n_src, k = cand.shape
    n_bag, b = bags.shape
    f = feat.shape[1]

    # Layout plumbing (outside the kernels): lane-dense, long axis last.
    weights_row = weights.reshape(1, n_dst)          # (1, n_dst)
    feat_t = feat.T                                  # (F, n_src)
    cand_t = cand.T                                  # (K, n_src)
    bags_t = bags.T                                  # (B, n_bag)

    ts = _pick_tile(n_src) if tile_s is None else tile_s
    tb = _pick_tile(n_bag) if tile_b is None else tile_b

    src_val_row, src_node_row = pl.pallas_call(
        _src_kernel,
        out_shape=(jax.ShapeDtypeStruct((1, n_src), jnp.float32),
                   jax.ShapeDtypeStruct((1, n_src), jnp.int32)),
        grid=(n_src // ts,),
        in_specs=[
            pl.BlockSpec((1, n_dst), lambda i: (0, 0)),
            pl.BlockSpec((f, ts), lambda i: (0, i)),
            pl.BlockSpec(memory_space=pltpu.MemorySpace.SMEM),   # (1, F) scalars
            pl.BlockSpec((k, ts), lambda i: (0, i)),
        ],
        out_specs=(
            pl.BlockSpec((1, ts), lambda i: (0, i)),
            pl.BlockSpec((1, ts), lambda i: (0, i)),
        ),
        compiler_params=pltpu.CompilerParams(
            dimension_semantics=("parallel",)),
    )(weights_row, feat_t, lin_w, cand_t)

    bag_max_row = pl.pallas_call(
        _bag_kernel,
        out_shape=jax.ShapeDtypeStruct((1, n_bag), jnp.float32),
        grid=(n_bag // tb,),
        in_specs=[
            pl.BlockSpec((b, tb), lambda i: (0, i)),
            pl.BlockSpec((1, n_src), lambda i: (0, 0)),
        ],
        out_specs=pl.BlockSpec((1, tb), lambda i: (0, i)),
        compiler_params=pltpu.CompilerParams(
            dimension_semantics=("parallel",)),
    )(bags_t, src_val_row)

    # Back to the module's (n, 1) column convention (cheap, outside the kernels).
    return (bag_max_row.reshape(n_bag, 1),
            src_val_row.reshape(n_src, 1),
            src_node_row.reshape(n_src, 1))


def output_layer_ref(weights, feat, lin_w, cand, bags):
    """Pure-JAX reference mirroring the (regularized) PyTorch forward."""
    score = feat @ lin_w.T                                   # (n_src, 1)
    gathered = weights[:, 0][cand]                           # (n_src, k)
    scaled = gathered * score
    src_val = scaled.max(axis=1, keepdims=True)
    src_node = cand[jnp.arange(cand.shape[0]), scaled.argmax(axis=1)][:, None]
    bag_max = src_val[:, 0][bags].max(axis=1, keepdims=True)
    return bag_max, src_val, src_node.astype(jnp.int32)


if __name__ == "__main__":
    key = jax.random.PRNGKey(0)
    k_w, k_f, k_lin, k_cand, k_bag = jax.random.split(key, 5)

    N_DST, N_SRC, K, N_BAG, B = 128, 16, 8, 4, 4

    weights = jax.random.normal(k_w, (N_DST, 1), dtype=jnp.float32)
    feat = jax.random.normal(k_f, (N_SRC, FEATURES_DIM), dtype=jnp.float32)
    # deterministic init of nn.Linear(FEATURES_DIM, 1, bias=False).weight -> (1, F)
    lim = 1.0 / (FEATURES_DIM ** 0.5)
    lin_w = jax.random.uniform(k_lin, (1, FEATURES_DIM),
                               minval=-lim, maxval=lim, dtype=jnp.float32)
    cand = jax.random.randint(k_cand, (N_SRC, K), 0, N_DST, dtype=jnp.int32)
    bags = jax.random.randint(k_bag, (N_BAG, B), 0, N_SRC, dtype=jnp.int32)

    bag_max, src_val, src_node = jax.block_until_ready(
        output_layer(weights, feat, lin_w, cand, bags))

    r_bag, r_val, r_node = output_layer_ref(weights, feat, lin_w, cand, bags)
    assert jnp.allclose(bag_max, r_bag, atol=1e-5), "bag max mismatch"
    assert jnp.allclose(src_val, r_val, atol=1e-5), "per-source value mismatch"
    assert jnp.array_equal(src_node, r_node), "per-source argmax node mismatch"

    print("KERNEL_OK")
</pallas_src>

<mosaic_0001>
module attributes {stable_mosaic.version = 11 : i64} {
  func.func @_src_kernel(%arg0: i32, %arg1: memref<1x128xf32, #tpu.memory_space<vmem>>, %arg2: memref<2x16xf32, #tpu.memory_space<vmem>>, %arg3: memref<1x2xf32, #tpu.memory_space<smem>>, %arg4: memref<8x16xi32, #tpu.memory_space<vmem>>, %arg5: memref<1x16xf32, #tpu.memory_space<vmem>>, %arg6: memref<1x16xi32, #tpu.memory_space<vmem>>) attributes {dimension_semantics = [#tpu.dimension_semantics<parallel>], iteration_bounds = array<i64: 1>, scalar_prefetch = 0 : i64, scratch_operands = 0 : i64, tpu.core_type = #tpu.core_type<tc>, window_params = [{pipeline_mode = #tpu.pipeline_mode<synchronous>, transform_indices = @transform_0, window_bounds = array<i64: 1, 128>}, {transform_indices = @transform_1, window_bounds = array<i64: 2, 16>}, {transform_indices = @transform_2, window_bounds = array<i64: 1, 2>}, {transform_indices = @transform_3, window_bounds = array<i64: 8, 16>}, {transform_indices = @transform_4, window_bounds = array<i64: 1, 16>}, {transform_indices = @transform_5, window_bounds = array<i64: 1, 16>}]} {
    %c0 = arith.constant 0 : index
    %c0_0 = arith.constant 0 : index
    %0 = vector.load %arg2[%c0, %c0_0] : memref<2x16xf32, #tpu.memory_space<vmem>>, vector<1x16xf32>
    %c0_1 = arith.constant 0 : index
    %c0_2 = arith.constant 0 : index
    %1 = memref.load %arg3[%c0_1, %c0_2] : memref<1x2xf32, #tpu.memory_space<smem>>
    %2 = vector.broadcast %1 : f32 to vector<1x16xf32>
    %3 = arith.mulf %0, %2 : vector<1x16xf32>
    %c1 = arith.constant 1 : index
    %c0_3 = arith.constant 0 : index
    %4 = vector.load %arg2[%c1, %c0_3] : memref<2x16xf32, #tpu.memory_space<vmem>>, vector<1x16xf32>
    %c0_4 = arith.constant 0 : index
    %c1_5 = arith.constant 1 : index
    %5 = memref.load %arg3[%c0_4, %c1_5] : memref<1x2xf32, #tpu.memory_space<smem>>
    %6 = vector.broadcast %5 : f32 to vector<1x16xf32>
    %7 = arith.mulf %4, %6 : vector<1x16xf32>
    %8 = arith.addf %3, %7 : vector<1x16xf32>
    %c0_6 = arith.constant 0 : index
    %c0_7 = arith.constant 0 : index
    %9 = vector.load %arg1[%c0_6, %c0_7] : memref<1x128xf32, #tpu.memory_space<vmem>>, vector<1x128xf32>
    %10 = tpu.iota {dimensions = array<i32: 0>} : vector<128x16xi32>
    %c0_8 = arith.constant 0 : index
    %c0_9 = arith.constant 0 : index
    %11 = vector.load %arg4[%c0_8, %c0_9] : memref<8x16xi32, #tpu.memory_space<vmem>>, vector<1x16xi32>
    %12 = vector.broadcast %11 : vector<1x16xi32> to vector<128x16xi32>
    %13 = arith.cmpi eq, %10, %12 : vector<128x16xi32>
    %14 = arith.extui %13 : vector<128x16xi1> to vector<128x16xi32>
    %15 = arith.sitofp %14 : vector<128x16xi32> to vector<128x16xf32>
    %cst = arith.constant dense<0.000000e+00> : vector<1x16xf32>
    %16 = tpu.matmul %9, %15, %cst {dimension_numbers = #tpu.dot_dimension_numbers<[1], [0], [0], [1], [0, 0, 1, 1], [], []>} : vector<1x128xf32>, vector<128x16xf32>, vector<1x16xf32> -> vector<1x16xf32>
    %17 = arith.mulf %16, %8 : vector<1x16xf32>
    %c1_10 = arith.constant 1 : index
    %c0_11 = arith.constant 0 : index
    %18 = vector.load %arg4[%c1_10, %c0_11] : memref<8x16xi32, #tpu.memory_space<vmem>>, vector<1x16xi32>
    %19 = vector.broadcast %18 : vector<1x16xi32> to vector<128x16xi32>
    %20 = arith.cmpi eq, %10, %19 : vector<128x16xi32>
    %21 = arith.extui %20 : vector<128x16xi1> to vector<128x16xi32>
    %22 = arith.sitofp %21 : vector<128x16xi32> to vector<128x16xf32>
    %cst_12 = arith.constant dense<0.000000e+00> : vector<1x16xf32>
    %23 = tpu.matmul %9, %22, %cst_12 {dimension_numbers = #tpu.dot_dimension_numbers<[1], [0], [0], [1], [0, 0, 1, 1], [], []>} : vector<1x128xf32>, vector<128x16xf32>, vector<1x16xf32> -> vector<1x16xf32>
    %24 = arith.mulf %23, %8 : vector<1x16xf32>
    %25 = arith.cmpf ogt, %24, %17 : vector<1x16xf32>
    %26 = arith.select %25, %24, %17 : vector<1x16xi1>, vector<1x16xf32>
    %27 = arith.select %25, %18, %11 : vector<1x16xi1>, vector<1x16xi32>
    %c2 = arith.constant 2 : index
    %c0_13 = arith.constant 0 : index
    %28 = vector.load %arg4[%c2, %c0_13] : memref<8x16xi32, #tpu.memory_space<vmem>>, vector<1x16xi32>
    %29 = vector.broadcast %28 : vector<1x16xi32> to vector<128x16xi32>
    %30 = arith.cmpi eq, %10, %29 : vector<128x16xi32>
    %31 = arith.extui %30 : vector<128x16xi1> to vector<128x16xi32>
    %32 = arith.sitofp %31 : vector<128x16xi32> to vector<128x16xf32>
    %cst_14 = arith.constant dense<0.000000e+00> : vector<1x16xf32>
    %33 = tpu.matmul %9, %32, %cst_14 {dimension_numbers = #tpu.dot_dimension_numbers<[1], [0], [0], [1], [0, 0, 1, 1], [], []>} : vector<1x128xf32>, vector<128x16xf32>, vector<1x16xf32> -> vector<1x16xf32>
    %34 = arith.mulf %33, %8 : vector<1x16xf32>
    %35 = arith.cmpf ogt, %34, %26 : vector<1x16xf32>
    %36 = arith.select %35, %34, %26 : vector<1x16xi1>, vector<1x16xf32>
    %37 = arith.select %35, %28, %27 : vector<1x16xi1>, vector<1x16xi32>
    %c3 = arith.constant 3 : index
    %c0_15 = arith.constant 0 : index
    %38 = vector.load %arg4[%c3, %c0_15] : memref<8x16xi32, #tpu.memory_space<vmem>>, vector<1x16xi32>
    %39 = vector.broadcast %38 : vector<1x16xi32> to vector<128x16xi32>
    %40 = arith.cmpi eq, %10, %39 : vector<128x16xi32>
    %41 = arith.extui %40 : vector<128x16xi1> to vector<128x16xi32>
    %42 = arith.sitofp %41 : vector<128x16xi32> to vector<128x16xf32>
    %cst_16 = arith.constant dense<0.000000e+00> : vector<1x16xf32>
    %43 = tpu.matmul %9, %42, %cst_16 {dimension_numbers = #tpu.dot_dimension_numbers<[1], [0], [0], [1], [0, 0, 1, 1], [], []>} : vector<1x128xf32>, vector<128x16xf32>, vector<1x16xf32> -> vector<1x16xf32>
    %44 = arith.mulf %43, %8 : vector<1x16xf32>
    %45 = arith.cmpf ogt, %44, %36 : vector<1x16xf32>
    %46 = arith.select %45, %44, %36 : vector<1x16xi1>, vector<1x16xf32>
    %47 = arith.select %45, %38, %37 : vector<1x16xi1>, vector<1x16xi32>
    %c4 = arith.constant 4 : index
    %c0_17 = arith.constant 0 : index
    %48 = vector.load %arg4[%c4, %c0_17] : memref<8x16xi32, #tpu.memory_space<vmem>>, vector<1x16xi32>
    %49 = vector.broadcast %48 : vector<1x16xi32> to vector<128x16xi32>
    %50 = arith.cmpi eq, %10, %49 : vector<128x16xi32>
    %51 = arith.extui %50 : vector<128x16xi1> to vector<128x16xi32>
    %52 = arith.sitofp %51 : vector<128x16xi32> to vector<128x16xf32>
    %cst_18 = arith.constant dense<0.000000e+00> : vector<1x16xf32>
    %53 = tpu.matmul %9, %52, %cst_18 {dimension_numbers = #tpu.dot_dimension_numbers<[1], [0], [0], [1], [0, 0, 1, 1], [], []>} : vector<1x128xf32>, vector<128x16xf32>, vector<1x16xf32> -> vector<1x16xf32>
    %54 = arith.mulf %53, %8 : vector<1x16xf32>
    %55 = arith.cmpf ogt, %54, %46 : vector<1x16xf32>
    %56 = arith.select %55, %54, %46 : vector<1x16xi1>, vector<1x16xf32>
    %57 = arith.select %55, %48, %47 : vector<1x16xi1>, vector<1x16xi32>
    %c5 = arith.constant 5 : index
    %c0_19 = arith.constant 0 : index
    %58 = vector.load %arg4[%c5, %c0_19] : memref<8x16xi32, #tpu.memory_space<vmem>>, vector<1x16xi32>
    %59 = vector.broadcast %58 : vector<1x16xi32> to vector<128x16xi32>
    %60 = arith.cmpi eq, %10, %59 : vector<128x16xi32>
    %61 = arith.extui %60 : vector<128x16xi1> to vector<128x16xi32>
    %62 = arith.sitofp %61 : vector<128x16xi32> to vector<128x16xf32>
    %cst_20 = arith.constant dense<0.000000e+00> : vector<1x16xf32>
    %63 = tpu.matmul %9, %62, %cst_20 {dimension_numbers = #tpu.dot_dimension_numbers<[1], [0], [0], [1], [0, 0, 1, 1], [], []>} : vector<1x128xf32>, vector<128x16xf32>, vector<1x16xf32> -> vector<1x16xf32>
    %64 = arith.mulf %63, %8 : vector<1x16xf32>
    %65 = arith.cmpf ogt, %64, %56 : vector<1x16xf32>
    %66 = arith.select %65, %64, %56 : vector<1x16xi1>, vector<1x16xf32>
    %67 = arith.select %65, %58, %57 : vector<1x16xi1>, vector<1x16xi32>
    %c6 = arith.constant 6 : index
    %c0_21 = arith.constant 0 : index
    %68 = vector.load %arg4[%c6, %c0_21] : memref<8x16xi32, #tpu.memory_space<vmem>>, vector<1x16xi32>
    %69 = vector.broadcast %68 : vector<1x16xi32> to vector<128x16xi32>
    %70 = arith.cmpi eq, %10, %69 : vector<128x16xi32>
    %71 = arith.extui %70 : vector<128x16xi1> to vector<128x16xi32>
    %72 = arith.sitofp %71 : vector<128x16xi32> to vector<128x16xf32>
    %cst_22 = arith.constant dense<0.000000e+00> : vector<1x16xf32>
    %73 = tpu.matmul %9, %72, %cst_22 {dimension_numbers = #tpu.dot_dimension_numbers<[1], [0], [0], [1], [0, 0, 1, 1], [], []>} : vector<1x128xf32>, vector<128x16xf32>, vector<1x16xf32> -> vector<1x16xf32>
    %74 = arith.mulf %73, %8 : vector<1x16xf32>
    %75 = arith.cmpf ogt, %74, %66 : vector<1x16xf32>
    %76 = arith.select %75, %74, %66 : vector<1x16xi1>, vector<1x16xf32>
    %77 = arith.select %75, %68, %67 : vector<1x16xi1>, vector<1x16xi32>
    %c7 = arith.constant 7 : index
    %c0_23 = arith.constant 0 : index
    %78 = vector.load %arg4[%c7, %c0_23] : memref<8x16xi32, #tpu.memory_space<vmem>>, vector<1x16xi32>
    %79 = vector.broadcast %78 : vector<1x16xi32> to vector<128x16xi32>
    %80 = arith.cmpi eq, %10, %79 : vector<128x16xi32>
    %81 = arith.extui %80 : vector<128x16xi1> to vector<128x16xi32>
    %82 = arith.sitofp %81 : vector<128x16xi32> to vector<128x16xf32>
    %cst_24 = arith.constant dense<0.000000e+00> : vector<1x16xf32>
    %83 = tpu.matmul %9, %82, %cst_24 {dimension_numbers = #tpu.dot_dimension_numbers<[1], [0], [0], [1], [0, 0, 1, 1], [], []>} : vector<1x128xf32>, vector<128x16xf32>, vector<1x16xf32> -> vector<1x16xf32>
    %84 = arith.mulf %83, %8 : vector<1x16xf32>
    %85 = arith.cmpf ogt, %84, %76 : vector<1x16xf32>
    %86 = arith.select %85, %84, %76 : vector<1x16xi1>, vector<1x16xf32>
    %87 = arith.select %85, %78, %77 : vector<1x16xi1>, vector<1x16xi32>
    %c0_25 = arith.constant 0 : index
    %c0_26 = arith.constant 0 : index
    %88 = vector.load %arg5[%c0_25, %c0_26] : memref<1x16xf32, #tpu.memory_space<vmem>>, vector<1x16xf32>
    tpu.vector_store %arg5[%c0_25, %c0_26], %86 {strides = array<i32>} : memref<1x16xf32, #tpu.memory_space<vmem>>, vector<1x16xf32>,
    %c0_27 = arith.constant 0 : index
    %c0_28 = arith.constant 0 : index
    %89 = vector.load %arg6[%c0_27, %c0_28] : memref<1x16xi32, #tpu.memory_space<vmem>>, vector<1x16xi32>
    tpu.vector_store %arg6[%c0_27, %c0_28], %87 {strides = array<i32>} : memref<1x16xi32, #tpu.memory_space<vmem>>, vector<1x16xi32>,
    return
  }
  func.func @transform_0(%arg0: i32) -> (i32, i32) {
    %c0_i32 = arith.constant 0 : i32
    %c0_i32_0 = arith.constant 0 : i32
    %c0_i32_1 = arith.constant 0 : i32
    return %c0_i32, %c0_i32_0 : i32, i32
  }
  func.func @transform_1(%arg0: i32) -> (i32, i32) {
    %c0_i32 = arith.constant 0 : i32
    %c0_i32_0 = arith.constant 0 : i32
    return %c0_i32, %arg0 : i32, i32
  }
  func.func @transform_2(%arg0: i32) -> (i32, i32) {
    %c0_i32 = arith.constant 0 : i32
    %c0_i32_0 = arith.constant 0 : i32
    %c0_i32_1 = arith.constant 0 : i32
    return %c0_i32, %c0_i32_0 : i32, i32
  }
  func.func @transform_3(%arg0: i32) -> (i32, i32) {
    %c0_i32 = arith.constant 0 : i32
    %c0_i32_0 = arith.constant 0 : i32
    return %c0_i32, %arg0 : i32, i32
  }
  func.func @transform_4(%arg0: i32) -> (i32, i32) {
    %c0_i32 = arith.constant 0 : i32
    %c0_i32_0 = arith.constant 0 : i32
    return %c0_i32, %arg0 : i32, i32
  }
  func.func @transform_5(%arg0: i32) -> (i32, i32) {
    %c0_i32 = arith.constant 0 : i32
    %c0_i32_0 = arith.constant 0 : i32
    return %c0_i32, %arg0 : i32, i32
  }
}

</mosaic_0001>

<llo_original>
// kernel: tpu_custom_call.1
$region0: #{tpu_custom_call.1}
  #allocation0 [shape = 'u32[]', space=smem, size = 0x4, offset = 0x4, fixed_abs, tag = 'smem constant byte address 0x4 - core index']
  #allocation1 [shape = 'u32[144,128]{1,0:T(1,128)}', space=vmem, size = 0x12000, scoped, tag = 'internal scratch']
  %s0 = inlined_call_operand.hbm [shape: f32[1,128], index: 0, kind: input, shape index: {}]
  %s1 = inlined_call_operand.vmem [shape: f32[2,16], index: 1, kind: input, shape index: {}]
  %s2 = inlined_call_operand.vmem [shape: f32[1,2], index: 2, kind: input, shape index: {}]
  %s3 = inlined_call_operand.vmem [shape: s32[8,16], index: 3, kind: input, shape index: {}]
  %s4 = inlined_call_operand.hbm [shape: f32[1,16], index: 4, kind: output, shape index: {0}]
  %s5 = inlined_call_operand.hbm [shape: s32[1,16], index: 5, kind: output, shape index: {1}]
  %6 = xla_tuple %s4, %s5
  %s7 = sld [smem:[#allocation0]]
  $region42: #{tpu_custom_call.1} parent=0
    _
  %s9 = ssub.s32 1, %s7
  %s10 = scalar_select 0, %s9, %s7
  $region1: #{tpu_custom_call.1} parent=0
    #allocation2 [shape = 'u8[512]{0}', space=vmem, size = 0x400, scoped, tag = 'input window, operand 0, single buffered']
    #allocation3 [shape = 's32[1]{0}', space=sflag, size = 0x4, scoped, tag = 'scoped memory for tpu_custom_call.1']
    #allocation4 [shape = 's32[1]{0}', space=sflag, size = 0x4, scoped, tag = 'scoped memory for tpu_custom_call.1']
    #allocation5 [shape = 's32[1]{0}', space=sflag, size = 0x4, scoped, tag = 'scoped memory for tpu_custom_call.1']
    #allocation6 [shape = 'u8[512]{0}', space=smem, size = 0x200, scoped, tag = 'input window, operand 2, single buffered']
    #allocation7 [shape = 'u8[512]{0}', space=vmem, size = 0x400, scoped, tag = 'output window, operand 0, single buffered']
    #allocation8 [shape = 'u8[512]{0}', space=vmem, size = 0x400, scoped, tag = 'output window, operand 1, single buffered']
    #allocation9 [shape = 's32[1]{0}', space=sflag, size = 0x4, scoped, tag = 'scoped memory for tpu_custom_call.1']
    %11 = vsyncpa [#allocation3], 0
    %12 = vsyncpa [#allocation5], 0
    %13 = vsyncpa [#allocation4], 0
    %14 = vsyncpa [#allocation9], 0
    // Predicated region
    $region2: #{tpu_custom_call.1} parent=1 // pred_check
      _
    $region3: #{tpu_custom_call.1} parent=1 // pred_check_branch
      %16 = sbr.rel (0) target = $region5
    $region4: #{tpu_custom_call.1} parent=1 // pred_region
      %s18 = ssub.s32 16, 16
      %19 = vsyncadd [#allocation3], %s18
      %s21 = sshll.u32 [#allocation2], 4
      %s22 = int_to_ptr.vmem [resolvable:$true] %s21
      %24 = dma.hbm_to_vmem [thread:$0]  %s0, 16, %s22, [#allocation3]
    $region5: #{tpu_custom_call.1} parent=1 // pred_fallthru
      _
    // Predicated region
    $region6: #{tpu_custom_call.1} parent=1 // pred_check
      _
    $region7: #{tpu_custom_call.1} parent=1 // pred_check_branch
      %26 = sbr.rel (0) target = $region9
    $region8: #{tpu_custom_call.1} parent=1 // pred_region
      _
    $region9: #{tpu_custom_call.1} parent=1 // pred_fallthru
      _
    // Predicated region
    $region10: #{tpu_custom_call.1} parent=1 // pred_check
      _
    $region11: #{tpu_custom_call.1} parent=1 // pred_check_branch
      %28 = sbr.rel (0) target = $region13
    $region12: #{tpu_custom_call.1} parent=1 // pred_region
      %s30 = ssub.s32 16, 16
      %31 = vsyncadd [#allocation5], %s30
      %s33 = sshll.u32 %s2, 4
      %s34 = int_to_ptr.vmem [resolvable:$true] %s33
      %36 = dma.vmem_to_smem %s34, 16, [#allocation6], [#allocation5]
    $region13: #{tpu_custom_call.1} parent=1 // pred_fallthru
      _
    // Predicated region
    $region14: #{tpu_custom_call.1} parent=1 // pred_check
      _
    $region15: #{tpu_custom_call.1} parent=1 // pred_check_branch
      %38 = sbr.rel (0) target = $region17
    $region16: #{tpu_custom_call.1} parent=1 // pred_region
      _
    $region17: #{tpu_custom_call.1} parent=1 // pred_fallthru
      _
    // Predicated region
    $region18: #{tpu_custom_call.1} parent=1 // pred_check
      _
    $region19: #{tpu_custom_call.1} parent=1 // pred_check_branch
      %40 = sbr.rel (0) target = $region21
    $region20: #{tpu_custom_call.1} parent=1 // pred_region
      %41 = dma.done [#allocation3], 16
    $region21: #{tpu_custom_call.1} parent=1 // pred_fallthru
      _
    // Predicated region
    $region22: #{tpu_custom_call.1} parent=1 // pred_check
      _
    $region23: #{tpu_custom_call.1} parent=1 // pred_check_branch
      %43 = sbr.rel (0) target = $region25
    $region24: #{tpu_custom_call.1} parent=1 // pred_region
      %44 = dma.done [#allocation5], 16
    $region25: #{tpu_custom_call.1} parent=1 // pred_fallthru
      _
    %45 = sfence
    %v46 = vld [vmem:[%s1] sm:$0x1]
    %s47 = sld [smem:[#allocation6]]
    %v48 = vstv %s47
    %v49 = vmul.f32 %v46, %v48
    %v50 = vld [vmem:[%s1 + $0x1] sm:$0x1]
    %s51 = sld [smem:[#allocation6 + $0x1]]
    %v52 = vstv %s51
    %v53 = vmul.f32 %v50, %v52
    %v54 = vadd.f32 %v49, %v53
    %v55 = vld [vmem:[#allocation2] sm:$0x1]
    %v56 = vlaneseq
    %v57 = vshrl.u32 %v56, 7
    %v58 = vadd.s32 %v57, 8
    %v59 = vadd.s32 %v57, 16
    %v60 = vadd.s32 %v57, 24
    %v61 = vadd.s32 %v57, 32
    %v62 = vadd.s32 %v57, 40
    %v63 = vadd.s32 %v57, 48
    %v64 = vadd.s32 %v57, 56
    %v65 = vadd.s32 %v57, 64
    %v66 = vadd.s32 %v57, 72
    %v67 = vadd.s32 %v57, 80
    %v68 = vadd.s32 %v57, 88
    %v69 = vadd.s32 %v57, 96
    %v70 = vadd.s32 %v57, 104
    %v71 = vadd.s32 %v57, 112
    %v72 = vadd.s32 %v57, 120
    %v73 = vld [vmem:[%s3] sm:$0x1]
    %v74 = vlaneseq
    %v75 = vshrl.u32 %v74, 7
    %v76 = vsub.s32 0, %v75
    %v77 = vrot.slane %v73, %v76
    %vm78 = vcmp.eq.s32.totalorder %v57, %v77
    %vm79 = vcmp.eq.s32.totalorder %v58, %v77
    %vm80 = vcmp.eq.s32.totalorder %v59, %v77
    %vm81 = vcmp.eq.s32.totalorder %v60, %v77
    %vm82 = vcmp.eq.s32.totalorder %v61, %v77
    %vm83 = vcmp.eq.s32.totalorder %v62, %v77
    %vm84 = vcmp.eq.s32.totalorder %v63, %v77
    %vm85 = vcmp.eq.s32.totalorder %v64, %v77
    %vm86 = vcmp.eq.s32.totalorder %v65, %v77
    %vm87 = vcmp.eq.s32.totalorder %v66, %v77
    %vm88 = vcmp.eq.s32.totalorder %v67, %v77
    %vm89 = vcmp.eq.s32.totalorder %v68, %v77
    %vm90 = vcmp.eq.s32.totalorder %v69, %v77
    %vm91 = vcmp.eq.s32.totalorder %v70, %v77
    %vm92 = vcmp.eq.s32.totalorder %v71, %v77
    %vm93 = vcmp.eq.s32.totalorder %v72, %v77
    %v94 = vsel %vm78, 1, 0
    %v95 = vsel %vm79, 1, 0
    %v96 = vsel %vm80, 1, 0
    %v97 = vsel %vm81, 1, 0
    %v98 = vsel %vm82, 1, 0
    %v99 = vsel %vm83, 1, 0
    %v100 = vsel %vm84, 1, 0
    %v101 = vsel %vm85, 1, 0
    %v102 = vsel %vm86, 1, 0
    %v103 = vsel %vm87, 1, 0
    %v104 = vsel %vm88, 1, 0
    %v105 = vsel %vm89, 1, 0
    %v106 = vsel %vm90, 1, 0
    %v107 = vsel %vm91, 1, 0
    %v108 = vsel %vm92, 1, 0
    %v109 = vsel %vm93, 1, 0
    %v110 = vcvt.s32.f32 %v94
    %v111 = vcvt.s32.f32 %v95
    %v112 = vcvt.s32.f32 %v96
    %v113 = vcvt.s32.f32 %v97
    %v114 = vcvt.s32.f32 %v98
    %v115 = vcvt.s32.f32 %v99
    %v116 = vcvt.s32.f32 %v100
    %v117 = vcvt.s32.f32 %v101
    %v118 = vcvt.s32.f32 %v102
    %v119 = vcvt.s32.f32 %v103
    %v120 = vcvt.s32.f32 %v104
    %v121 = vcvt.s32.f32 %v105
    %v122 = vcvt.s32.f32 %v106
    %v123 = vcvt.s32.f32 %v107
    %v124 = vcvt.s32.f32 %v108
    %v125 = vcvt.s32.f32 %v109
    %126 = vmatprep.subr.mxu0 0.0
    %127 = vmatpush1.msra.mxu0 %v110
    %128 = vmatprep.subr.mxu0 0.0
    %129 = vmatpush1.msra.mxu0 %v111
    %130 = vmatprep.subr.mxu0 0.0
    %131 = vmatpush1.msra.mxu0 %v112
    %132 = vmatprep.subr.mxu0 0.0
    %133 = vmatpush1.msra.mxu0 %v113
    %134 = vmatprep.subr.mxu0 0.0
    %135 = vmatpush1.msra.mxu0 %v114
    %136 = vmatprep.subr.mxu0 0.0
    %137 = vmatpush1.msra.mxu0 %v115
    %138 = vmatprep.subr.mxu0 0.0
    %139 = vmatpush1.msra.mxu0 %v116
    %140 = vmatprep.subr.mxu0 0.0
    %141 = vmatpush1.msra.mxu0 %v117
    %142 = vmatprep.subr.mxu0 0.0
    %143 = vmatpush1.msra.mxu0 %v118
    %144 = vmatprep.subr.mxu0 0.0
    %145 = vmatpush1.msra.mxu0 %v119
    %146 = vmatprep.subr.mxu0 0.0
    %147 = vmatpush1.msra.mxu0 %v120
    %148 = vmatprep.subr.mxu0 0.0
    %149 = vmatpush1.msra.mxu0 %v121
    %150 = vmatprep.subr.mxu0 0.0
    %151 = vmatpush1.msra.mxu0 %v122
    %152 = vmatprep.subr.mxu0 0.0
    %153 = vmatpush1.msra.mxu0 %v123
    %154 = vmatprep.subr.mxu0 0.0
    %155 = vmatpush1.msra.mxu0 %v124
    %156 = vmatprep.subr.mxu0 0.0
    %157 = vmatpush1.msra.mxu0 %v125
    %158 = vmatprep.subr.mxu0 0.0
    %159 = vmatpush1.msra.mxu0 0.0
    %160 = vmatprep.subr.mxu0 0.0
    %161 = vmatpush1.msra.mxu0 0.0
    %162 = vmatprep.subr.mxu0 0.0
    %163 = vmatpush1.msra.mxu0 0.0
    %164 = vmatprep.subr.mxu0 0.0
    %165 = vmatpush1.msra.mxu0 0.0
    %166 = vmatprep.subr.mxu0 0.0
    %167 = vmatpush1.msra.mxu0 0.0
    %168 = vmatprep.subr.mxu0 0.0
    %169 = vmatpush1.msra.mxu0 0.0
    %170 = vmatprep.subr.mxu0 0.0
    %171 = vmatpush1.msra.mxu0 0.0
    %172 = vmatprep.subr.mxu0 0.0
    %173 = vmatpush1.msra.mxu0 0.0
    %174 = vmatprep.subr.mxu0 0.0
    %175 = vmatpush1.msra.mxu0 0.0
    %176 = vmatprep.subr.mxu0 0.0
    %177 = vmatpush1.msra.mxu0 0.0
    %178 = vmatprep.subr.mxu0 0.0
    %179 = vmatpush1.msra.mxu0 0.0
    %180 = vmatprep.subr.mxu0 0.0
    %181 = vmatpush1.msra.mxu0 0.0
    %182 = vmatprep.subr.mxu0 0.0
    %183 = vmatpush1.msra.mxu0 0.0
    %184 = vmatprep.subr.mxu0 0.0
    %185 = vmatpush1.msra.mxu0 0.0
    %186 = vmatprep.subr.mxu0 0.0
    %187 = vmatpush1.msra.mxu0 0.0
    %188 = vmatprep.subr.mxu0 0.0
    %189 = vmatpush1.msra.mxu0 0.0
    %190 = vmatprep.mubr.f32.mxu0 0.0
    %191 = vmatmul.mubr.f32.gmra.mrb[0].mxu0 %v55
    %v192 = vpop.f32.mrb[0].mxu0
    %v193 = vadd.f32 0.0, %v192
    %v194 = vpop.f32.mrb[0].mxu0
    %195 = vdwg.mxu0
    %v196 = vmul.f32 %v193, %v54
    %v197 = vld [vmem:[%s3 + $0x1] sm:$0x1]
    %v198 = vlaneseq
    %v199 = vshrl.u32 %v198, 7
    %v200 = vsub.s32 0, %v199
    %v201 = vrot.slane %v197, %v200
    %vm202 = vcmp.eq.s32.totalorder %v57, %v201
    %vm203 = vcmp.eq.s32.totalorder %v58, %v201
    %vm204 = vcmp.eq.s32.totalorder %v59, %v201
    %vm205 = vcmp.eq.s32.totalorder %v60, %v201
    %vm206 = vcmp.eq.s32.totalorder %v61, %v201
    %vm207 = vcmp.eq.s32.totalorder %v62, %v201
    %vm208 = vcmp.eq.s32.totalorder %v63, %v201
    %vm209 = vcmp.eq.s32.totalorder %v64, %v201
    %vm210 = vcmp.eq.s32.totalorder %v65, %v201
    %vm211 = vcmp.eq.s32.totalorder %v66, %v201
    %vm212 = vcmp.eq.s32.totalorder %v67, %v201
    %vm213 = vcmp.eq.s32.totalorder %v68, %v201
    %vm214 = vcmp.eq.s32.totalorder %v69, %v201
    %vm215 = vcmp.eq.s32.totalorder %v70, %v201
    %vm216 = vcmp.eq.s32.totalorder %v71, %v201
    %vm217 = vcmp.eq.s32.totalorder %v72, %v201
    %v218 = vsel %vm202, 1, 0
    %v219 = vsel %vm203, 1, 0
    %v220 = vsel %vm204, 1, 0
    %v221 = vsel %vm205, 1, 0
    %v222 = vsel %vm206, 1, 0
    %v223 = vsel %vm207, 1, 0
    %v224 = vsel %vm208, 1, 0
    %v225 = vsel %vm209, 1, 0
    %v226 = vsel %vm210, 1, 0
    %v227 = vsel %vm211, 1, 0
    %v228 = vsel %vm212, 1, 0
    %v229 = vsel %vm213, 1, 0
    %v230 = vsel %vm214, 1, 0
    %v231 = vsel %vm215, 1, 0
    %v232 = vsel %vm216, 1, 0
    %v233 = vsel %vm217, 1, 0
    %v234 = vcvt.s32.f32 %v218
    %v235 = vcvt.s32.f32 %v219
    %v236 = vcvt.s32.f32 %v220
    %v237 = vcvt.s32.f32 %v221
    %v238 = vcvt.s32.f32 %v222
    %v239 = vcvt.s32.f32 %v223
    %v240 = vcvt.s32.f32 %v224
    %v241 = vcvt.s32.f32 %v225
    %v242 = vcvt.s32.f32 %v226
    %v243 = vcvt.s32.f32 %v227
    %v244 = vcvt.s32.f32 %v228
    %v245 = vcvt.s32.f32 %v229
    %v246 = vcvt.s32.f32 %v230
    %v247 = vcvt.s32.f32 %v231
    %v248 = vcvt.s32.f32 %v232
    %v249 = vcvt.s32.f32 %v233
    %250 = vmatprep.subr.mxu0 0.0
    %251 = vmatpush1.msra.mxu0 %v234
    %252 = vmatprep.subr.mxu0 0.0
    %253 = vmatpush1.msra.mxu0 %v235
    %254 = vmatprep.subr.mxu0 0.0
    %255 = vmatpush1.msra.mxu0 %v236
    %256 = vmatprep.subr.mxu0 0.0
    %257 = vmatpush1.msra.mxu0 %v237
    %258 = vmatprep.subr.mxu0 0.0
    %259 = vmatpush1.msra.mxu0 %v238
    %260 = vmatprep.subr.mxu0 0.0
    %261 = vmatpush1.msra.mxu0 %v239
    %262 = vmatprep.subr.mxu0 0.0
    %263 = vmatpush1.msra.mxu0 %v240
    %264 = vmatprep.subr.mxu0 0.0
    %265 = vmatpush1.msra.mxu0 %v241
    %266 = vmatprep.subr.mxu0 0.0
    %267 = vmatpush1.msra.mxu0 %v242
    %268 = vmatprep.subr.mxu0 0.0
    %269 = vmatpush1.msra.mxu0 %v243
    %270 = vmatprep.subr.mxu0 0.0
    %271 = vmatpush1.msra.mxu0 %v244
    %272 = vmatprep.subr.mxu0 0.0
    %273 = vmatpush1.msra.mxu0 %v245
    %274 = vmatprep.subr.mxu0 0.0
    %275 = vmatpush1.msra.mxu0 %v246
    %276 = vmatprep.subr.mxu0 0.0
    %277 = vmatpush1.msra.mxu0 %v247
    %278 = vmatprep.subr.mxu0 0.0
    %279 = vmatpush1.msra.mxu0 %v248
    %280 = vmatprep.subr.mxu0 0.0
    %281 = vmatpush1.msra.mxu0 %v249
    %282 = vmatprep.subr.mxu0 0.0
    %283 = vmatpush1.msra.mxu0 0.0
    %284 = vmatprep.subr.mxu0 0.0
    %285 = vmatpush1.msra.mxu0 0.0
    %286 = vmatprep.subr.mxu0 0.0
    %287 = vmatpush1.msra.mxu0 0.0
    %288 = vmatprep.subr.mxu0 0.0
    %289 = vmatpush1.msra.mxu0 0.0
    %290 = vmatprep.subr.mxu0 0.0
    %291 = vmatpush1.msra.mxu0 0.0
    %292 = vmatprep.subr.mxu0 0.0
    %293 = vmatpush1.msra.mxu0 0.0
    %294 = vmatprep.subr.mxu0 0.0
    %295 = vmatpush1.msra.mxu0 0.0
    %296 = vmatprep.subr.mxu0 0.0
    %297 = vmatpush1.msra.mxu0 0.0
    %298 = vmatprep.subr.mxu0 0.0
    %299 = vmatpush1.msra.mxu0 0.0
    %300 = vmatprep.subr.mxu0 0.0
    %301 = vmatpush1.msra.mxu0 0.0
    %302 = vmatprep.subr.mxu0 0.0
    %303 = vmatpush1.msra.mxu0 0.0
    %304 = vmatprep.subr.mxu0 0.0
    %305 = vmatpush1.msra.mxu0 0.0
    %306 = vmatprep.subr.mxu0 0.0
    %307 = vmatpush1.msra.mxu0 0.0
    %308 = vmatprep.subr.mxu0 0.0
    %309 = vmatpush1.msra.mxu0 0.0
    %310 = vmatprep.subr.mxu0 0.0
    %311 = vmatpush1.msra.mxu0 0.0
    %312 = vmatprep.subr.mxu0 0.0
    %313 = vmatpush1.msra.mxu0 0.0
    %314 = vmatprep.mubr.f32.mxu0 0.0
    %315 = vmatmul.mubr.f32.gmra.mrb[0].mxu0 %v55
    %v316 = vpop.f32.mrb[0].mxu0
    %v317 = vadd.f32 0.0, %v316
    %v318 = vpop.f32.mrb[0].mxu0
    %319 = vdwg.mxu0
    %v320 = vmul.f32 %v317, %v54
    %vm321 = vcmp.gt.f32.partialorder %v320, %v196
    %v322 = vsel %vm321, %v320, %v196
    %v323 = vsel %vm321, %v197, %v73
    %v324 = vld [vmem:[%s3 + $0x2] sm:$0x1]
    %v325 = vlaneseq
    %v326 = vshrl.u32 %v325, 7
    %v327 = vsub.s32 0, %v326
    %v328 = vrot.slane %v324, %v327
    %vm329 = vcmp.eq.s32.totalorder %v57, %v328
    %vm330 = vcmp.eq.s32.totalorder %v58, %v328
    %vm331 = vcmp.eq.s32.totalorder %v59, %v328
    %vm332 = vcmp.eq.s32.totalorder %v60, %v328
    %vm333 = vcmp.eq.s32.totalorder %v61, %v328
    %vm334 = vcmp.eq.s32.totalorder %v62, %v328
    %vm335 = vcmp.eq.s32.totalorder %v63, %v328
    %vm336 = vcmp.eq.s32.totalorder %v64, %v328
    %vm337 = vcmp.eq.s32.totalorder %v65, %v328
    %vm338 = vcmp.eq.s32.totalorder %v66, %v328
    %vm339 = vcmp.eq.s32.totalorder %v67, %v328
    %vm340 = vcmp.eq.s32.totalorder %v68, %v328
    %vm341 = vcmp.eq.s32.totalorder %v69, %v328
    %vm342 = vcmp.eq.s32.totalorder %v70, %v328
    %vm343 = vcmp.eq.s32.totalorder %v71, %v328
    %vm344 = vcmp.eq.s32.totalorder %v72, %v328
    %v345 = vsel %vm329, 1, 0
    %v346 = vsel %vm330, 1, 0
    %v347 = vsel %vm331, 1, 0
    %v348 = vsel %vm332, 1, 0
    %v349 = vsel %vm333, 1, 0
    %v350 = vsel %vm334, 1, 0
    %v351 = vsel %vm335, 1, 0
    %v352 = vsel %vm336, 1, 0
    %v353 = vsel %vm337, 1, 0
    %v354 = vsel %vm338, 1, 0
    %v355 = vsel %vm339, 1, 0
    %v356 = vsel %vm340, 1, 0
    %v357 = vsel %vm341, 1, 0
    %v358 = vsel %vm342, 1, 0
    %v359 = vsel %vm343, 1, 0
    %v360 = vsel %vm344, 1, 0
    %v361 = vcvt.s32.f32 %v345
    %v362 = vcvt.s32.f32 %v346
    %v363 = vcvt.s32.f32 %v347
    %v364 = vcvt.s32.f32 %v348
    %v365 = vcvt.s32.f32 %v349
    %v366 = vcvt.s32.f32 %v350
    %v367 = vcvt.s32.f32 %v351
    %v368 = vcvt.s32.f32 %v352
    %v369 = vcvt.s32.f32 %v353
    %v370 = vcvt.s32.f32 %v354
    %v371 = vcvt.s32.f32 %v355
    %v372 = vcvt.s32.f32 %v356
    %v373 = vcvt.s32.f32 %v357
    %v374 = vcvt.s32.f32 %v358
    %v375 = vcvt.s32.f32 %v359
    %v376 = vcvt.s32.f32 %v360
    %377 = vmatprep.subr.mxu0 0.0
    %378 = vmatpush1.msra.mxu0 %v361
    %379 = vmatprep.subr.mxu0 0.0
    %380 = vmatpush1.msra.mxu0 %v362
    %381 = vmatprep.subr.mxu0 0.0
    %382 = vmatpush1.msra.mxu0 %v363
    %383 = vmatprep.subr.mxu0 0.0
    %384 = vmatpush1.msra.mxu0 %v364
    %385 = vmatprep.subr.mxu0 0.0
    %386 = vmatpush1.msra.mxu0 %v365
    %387 = vmatprep.subr.mxu0 0.0
    %388 = vmatpush1.msra.mxu0 %v366
    %389 = vmatprep.subr.mxu0 0.0
    %390 = vmatpush1.msra.mxu0 %v367
    %391 = vmatprep.subr.mxu0 0.0
    %392 = vmatpush1.msra.mxu0 %v368
    %393 = vmatprep.subr.mxu0 0.0
    %394 = vmatpush1.msra.mxu0 %v369
    %395 = vmatprep.subr.mxu0 0.0
    %396 = vmatpush1.msra.mxu0 %v370
    %397 = vmatprep.subr.mxu0 0.0
    %398 = vmatpush1.msra.mxu0 %v371
    %399 = vmatprep.subr.mxu0 0.0
    %400 = vmatpush1.msra.mxu0 %v372
    %401 = vmatprep.subr.mxu0 0.0
    %402 = vmatpush1.msra.mxu0 %v373
    %403 = vmatprep.subr.mxu0 0.0
    %404 = vmatpush1.msra.mxu0 %v374
    %405 = vmatprep.subr.mxu0 0.0
    %406 = vmatpush1.msra.mxu0 %v375
    %407 = vmatprep.subr.mxu0 0.0
    %408 = vmatpush1.msra.mxu0 %v376
    %409 = vmatprep.subr.mxu0 0.0
    %410 = vmatpush1.msra.mxu0 0.0
    %411 = vmatprep.subr.mxu0 0.0
    %412 = vmatpush1.msra.mxu0 0.0
    %413 = vmatprep.subr.mxu0 0.0
    %414 = vmatpush1.msra.mxu0 0.0
    %415 = vmatprep.subr.mxu0 0.0
    %416 = vmatpush1.msra.mxu0 0.0
    %417 = vmatprep.subr.mxu0 0.0
    %418 = vmatpush1.msra.mxu0 0.0
    %419 = vmatprep.subr.mxu0 0.0
    %420 = vmatpush1.msra.mxu0 0.0
    %421 = vmatprep.subr.mxu0 0.0
    %422 = vmatpush1.msra.mxu0 0.0
    %423 = vmatprep.subr.mxu0 0.0
    %424 = vmatpush1.msra.mxu0 0.0
    %425 = vmatprep.subr.mxu0 0.0
    %426 = vmatpush1.msra.mxu0 0.0
    %427 = vmatprep.subr.mxu0 0.0
    %428 = vmatpush1.msra.mxu0 0.0
    %429 = vmatprep.subr.mxu0 0.0
    %430 = vmatpush1.msra.mxu0 0.0
    %431 = vmatprep.subr.mxu0 0.0
    %432 = vmatpush1.msra.mxu0 0.0
    %433 = vmatprep.subr.mxu0 0.0
    %434 = vmatpush1.msra.mxu0 0.0
    %435 = vmatprep.subr.mxu0 0.0
    %436 = vmatpush1.msra.mxu0 0.0
    %437 = vmatprep.subr.mxu0 0.0
    %438 = vmatpush1.msra.mxu0 0.0
    %439 = vmatprep.subr.mxu0 0.0
    %440 = vmatpush1.msra.mxu0 0.0
    %441 = vmatprep.mubr.f32.mxu0 0.0
    %442 = vmatmul.mubr.f32.gmra.mrb[0].mxu0 %v55
    %v443 = vpop.f32.mrb[0].mxu0
    %v444 = vadd.f32 0.0, %v443
    %v445 = vpop.f32.mrb[0].mxu0
    %446 = vdwg.mxu0
    %v447 = vmul.f32 %v444, %v54
    %vm448 = vcmp.gt.f32.partialorder %v447, %v322
    %v449 = vsel %vm448, %v447, %v322
    %v450 = vsel %vm448, %v324, %v323
    %v451 = vld [vmem:[%s3 + $0x3] sm:$0x1]
    %v452 = vlaneseq
    %v453 = vshrl.u32 %v452, 7
    %v454 = vsub.s32 0, %v453
    %v455 = vrot.slane %v451, %v454
    %vm456 = vcmp.eq.s32.totalorder %v57, %v455
    %vm457 = vcmp.eq.s32.totalorder %v58, %v455
    %vm458 = vcmp.eq.s32.totalorder %v59, %v455
    %vm459 = vcmp.eq.s32.totalorder %v60, %v455
    %vm460 = vcmp.eq.s32.totalorder %v61, %v455
    %vm461 = vcmp.eq.s32.totalorder %v62, %v455
    %vm462 = vcmp.eq.s32.totalorder %v63, %v455
    %vm463 = vcmp.eq.s32.totalorder %v64, %v455
    %vm464 = vcmp.eq.s32.totalorder %v65, %v455
    %vm465 = vcmp.eq.s32.totalorder %v66, %v455
    %vm466 = vcmp.eq.s32.totalorder %v67, %v455
    %vm467 = vcmp.eq.s32.totalorder %v68, %v455
    %vm468 = vcmp.eq.s32.totalorder %v69, %v455
    %vm469 = vcmp.eq.s32.totalorder %v70, %v455
    %vm470 = vcmp.eq.s32.totalorder %v71, %v455
    %vm471 = vcmp.eq.s32.totalorder %v72, %v455
    %v472 = vsel %vm456, 1, 0
    %v473 = vsel %vm457, 1, 0
    %v474 = vsel %vm458, 1, 0
    %v475 = vsel %vm459, 1, 0
    %v476 = vsel %vm460, 1, 0
    %v477 = vsel %vm461, 1, 0
    %v478 = vsel %vm462, 1, 0
    %v479 = vsel %vm463, 1, 0
    %v480 = vsel %vm464, 1, 0
    %v481 = vsel %vm465, 1, 0
    %v482 = vsel %vm466, 1, 0
    %v483 = vsel %vm467, 1, 0
    %v484 = vsel %vm468, 1, 0
    %v485 = vsel %vm469, 1, 0
    %v486 = vsel %vm470, 1, 0
    %v487 = vsel %vm471, 1, 0
    %v488 = vcvt.s32.f32 %v472
    %v489 = vcvt.s32.f32 %v473
    %v490 = vcvt.s32.f32 %v474
    %v491 = vcvt.s32.f32 %v475
    %v492 = vcvt.s32.f32 %v476
    %v493 = vcvt.s32.f32 %v477
    %v494 = vcvt.s32.f32 %v478
    %v495 = vcvt.s32.f32 %v479
    %v496 = vcvt.s32.f32 %v480
    %v497 = vcvt.s32.f32 %v481
    %v498 = vcvt.s32.f32 %v482
    %v499 = vcvt.s32.f32 %v483
    %v500 = vcvt.s32.f32 %v484
    %v501 = vcvt.s32.f32 %v485
    %v502 = vcvt.s32.f32 %v486
    %v503 = vcvt.s32.f32 %v487
    %504 = vmatprep.subr.mxu0 0.0
    %505 = vmatpush1.msra.mxu0 %v488
    %506 = vmatprep.subr.mxu0 0.0
    %507 = vmatpush1.msra.mxu0 %v489
    %508 = vmatprep.subr.mxu0 0.0
    %509 = vmatpush1.msra.mxu0 %v490
    %510 = vmatprep.subr.mxu0 0.0
    %511 = vmatpush1.msra.mxu0 %v491
    %512 = vmatprep.subr.mxu0 0.0
    %513 = vmatpush1.msra.mxu0 %v492
    %514 = vmatprep.subr.mxu0 0.0
    %515 = vmatpush1.msra.mxu0 %v493
    %516 = vmatprep.subr.mxu0 0.0
    %517 = vmatpush1.msra.mxu0 %v494
    %518 = vmatprep.subr.mxu0 0.0
    %519 = vmatpush1.msra.mxu0 %v495
    %520 = vmatprep.subr.mxu0 0.0
    %521 = vmatpush1.msra.mxu0 %v496
    %522 = vmatprep.subr.mxu0 0.0
    %523 = vmatpush1.msra.mxu0 %v497
    %524 = vmatprep.subr.mxu0 0.0
    %525 = vmatpush1.msra.mxu0 %v498
    %526 = vmatprep.subr.mxu0 0.0
    %527 = vmatpush1.msra.mxu0 %v499
    %528 = vmatprep.subr.mxu0 0.0
    %529 = vmatpush1.msra.mxu0 %v500
    %530 = vmatprep.subr.mxu0 0.0
    %531 = vmatpush1.msra.mxu0 %v501
    %532 = vmatprep.subr.mxu0 0.0
    %533 = vmatpush1.msra.mxu0 %v502
    %534 = vmatprep.subr.mxu0 0.0
    %535 = vmatpush1.msra.mxu0 %v503
    %536 = vmatprep.subr.mxu0 0.0
    %537 = vmatpush1.msra.mxu0 0.0
    %538 = vmatprep.subr.mxu0 0.0
    %539 = vmatpush1.msra.mxu0 0.0
    %540 = vmatprep.subr.mxu0 0.0
    %541 = vmatpush1.msra.mxu0 0.0
    %542 = vmatprep.subr.mxu0 0.0
    %543 = vmatpush1.msra.mxu0 0.0
    %544 = vmatprep.subr.mxu0 0.0
    %545 = vmatpush1.msra.mxu0 0.0
    %546 = vmatprep.subr.mxu0 0.0
    %547 = vmatpush1.msra.mxu0 0.0
    %548 = vmatprep.subr.mxu0 0.0
    %549 = vmatpush1.msra.mxu0 0.0
    %550 = vmatprep.subr.mxu0 0.0
    %551 = vmatpush1.msra.mxu0 0.0
    %552 = vmatprep.subr.mxu0 0.0
    %553 = vmatpush1.msra.mxu0 0.0
    %554 = vmatprep.subr.mxu0 0.0
    %555 = vmatpush1.msra.mxu0 0.0
    %556 = vmatprep.subr.mxu0 0.0
    %557 = vmatpush1.msra.mxu0 0.0
    %558 = vmatprep.subr.mxu0 0.0
    %559 = vmatpush1.msra.mxu0 0.0
    %560 = vmatprep.subr.mxu0 0.0
    %561 = vmatpush1.msra.mxu0 0.0
    %562 = vmatprep.subr.mxu0 0.0
    %563 = vmatpush1.msra.mxu0 0.0
    %564 = vmatprep.subr.mxu0 0.0
    %565 = vmatpush1.msra.mxu0 0.0
    %566 = vmatprep.subr.mxu0 0.0
    %567 = vmatpush1.msra.mxu0 0.0
    %568 = vmatprep.mubr.f32.mxu0 0.0
    %569 = vmatmul.mubr.f32.gmra.mrb[0].mxu0 %v55
    %v570 = vpop.f32.mrb[0].mxu0
    %v571 = vadd.f32 0.0, %v570
    %v572 = vpop.f32.mrb[0].mxu0
    %573 = vdwg.mxu0
    %v574 = vmul.f32 %v571, %v54
    %vm575 = vcmp.gt.f32.partialorder %v574, %v449
    %v576 = vsel %vm575, %v574, %v449
    %v577 = vsel %vm575, %v451, %v450
    %v578 = vld [vmem:[%s3 + $0x4] sm:$0x1]
    %v579 = vlaneseq
    %v580 = vshrl.u32 %v579, 7
    %v581 = vsub.s32 0, %v580
    %v582 = vrot.slane %v578, %v581
    %vm583 = vcmp.eq.s32.totalorder %v57, %v582
    %vm584 = vcmp.eq.s32.totalorder %v58, %v582
    %vm585 = vcmp.eq.s32.totalorder %v59, %v582
    %vm586 = vcmp.eq.s32.totalorder %v60, %v582
    %vm587 = vcmp.eq.s32.totalorder %v61, %v582
    %vm588 = vcmp.eq.s32.totalorder %v62, %v582
    %vm589 = vcmp.eq.s32.totalorder %v63, %v582
    %vm590 = vcmp.eq.s32.totalorder %v64, %v582
    %vm591 = vcmp.eq.s32.totalorder %v65, %v582
    %vm592 = vcmp.eq.s32.totalorder %v66, %v582
    %vm593 = vcmp.eq.s32.totalorder %v67, %v582
    %vm594 = vcmp.eq.s32.totalorder %v68, %v582
    %vm595 = vcmp.eq.s32.totalorder %v69, %v582
    %vm596 = vcmp.eq.s32.totalorder %v70, %v582
    %vm597 = vcmp.eq.s32.totalorder %v71, %v582
    %vm598 = vcmp.eq.s32.totalorder %v72, %v582
    %v599 = vsel %vm583, 1, 0
    %v600 = vsel %vm584, 1, 0
    %v601 = vsel %vm585, 1, 0
    %v602 = vsel %vm586, 1, 0
    %v603 = vsel %vm587, 1, 0
    %v604 = vsel %vm588, 1, 0
    %v605 = vsel %vm589, 1, 0
    %v606 = vsel %vm590, 1, 0
    %v607 = vsel %vm591, 1, 0
    %v608 = vsel %vm592, 1, 0
    %v609 = vsel %vm593, 1, 0
    %v610 = vsel %vm594, 1, 0
    %v611 = vsel %vm595, 1, 0
    %v612 = vsel %vm596, 1, 0
    %v613 = vsel %vm597, 1, 0
    %v614 = vsel %vm598, 1, 0
    %v615 = vcvt.s32.f32 %v599
    %v616 = vcvt.s32.f32 %v600
    %v617 = vcvt.s32.f32 %v601
    %v618 = vcvt.s32.f32 %v602
    %v619 = vcvt.s32.f32 %v603
    %v620 = vcvt.s32.f32 %v604
    %v621 = vcvt.s32.f32 %v605
    %v622 = vcvt.s32.f32 %v606
    %v623 = vcvt.s32.f32 %v607
    %v624 = vcvt.s32.f32 %v608
    %v625 = vcvt.s32.f32 %v609
    %v626 = vcvt.s32.f32 %v610
    %v627 = vcvt.s32.f32 %v611
    %v628 = vcvt.s32.f32 %v612
    %v629 = vcvt.s32.f32 %v613
    %v630 = vcvt.s32.f32 %v614
    %631 = vmatprep.subr.mxu0 0.0
    %632 = vmatpush1.msra.mxu0 %v615
    %633 = vmatprep.subr.mxu0 0.0
    %634 = vmatpush1.msra.mxu0 %v616
    %635 = vmatprep.subr.mxu0 0.0
    %636 = vmatpush1.msra.mxu0 %v617
    %637 = vmatprep.subr.mxu0 0.0
    %638 = vmatpush1.msra.mxu0 %v618
    %639 = vmatprep.subr.mxu0 0.0
    %640 = vmatpush1.msra.mxu0 %v619
    %641 = vmatprep.subr.mxu0 0.0
    %642 = vmatpush1.msra.mxu0 %v620
    %643 = vmatprep.subr.mxu0 0.0
    %644 = vmatpush1.msra.mxu0 %v621
    %645 = vmatprep.subr.mxu0 0.0
    %646 = vmatpush1.msra.mxu0 %v622
    %647 = vmatprep.subr.mxu0 0.0
    %648 = vmatpush1.msra.mxu0 %v623
    %649 = vmatprep.subr.mxu0 0.0
    %650 = vmatpush1.msra.mxu0 %v624
    %651 = vmatprep.subr.mxu0 0.0
    %652 = vmatpush1.msra.mxu0 %v625
    %653 = vmatprep.subr.mxu0 0.0
    %654 = vmatpush1.msra.mxu0 %v626
    %655 = vmatprep.subr.mxu0 0.0
    %656 = vmatpush1.msra.mxu0 %v627
    %657 = vmatprep.subr.mxu0 0.0
    %658 = vmatpush1.msra.mxu0 %v628
    %659 = vmatprep.subr.mxu0 0.0
    %660 = vmatpush1.msra.mxu0 %v629
    %661 = vmatprep.subr.mxu0 0.0
    %662 = vmatpush1.msra.mxu0 %v630
    %663 = vmatprep.subr.mxu0 0.0
    %664 = vmatpush1.msra.mxu0 0.0
    %665 = vmatprep.subr.mxu0 0.0
    %666 = vmatpush1.msra.mxu0 0.0
    %667 = vmatprep.subr.mxu0 0.0
    %668 = vmatpush1.msra.mxu0 0.0
    %669 = vmatprep.subr.mxu0 0.0
    %670 = vmatpush1.msra.mxu0 0.0
    %671 = vmatprep.subr.mxu0 0.0
    %672 = vmatpush1.msra.mxu0 0.0
    %673 = vmatprep.subr.mxu0 0.0
    %674 = vmatpush1.msra.mxu0 0.0
    %675 = vmatprep.subr.mxu0 0.0
    %676 = vmatpush1.msra.mxu0 0.0
    %677 = vmatprep.subr.mxu0 0.0
    %678 = vmatpush1.msra.mxu0 0.0
    %679 = vmatprep.subr.mxu0 0.0
    %680 = vmatpush1.msra.mxu0 0.0
    %681 = vmatprep.subr.mxu0 0.0
    %682 = vmatpush1.msra.mxu0 0.0
    %683 = vmatprep.subr.mxu0 0.0
    %684 = vmatpush1.msra.mxu0 0.0
    %685 = vmatprep.subr.mxu0 0.0
    %686 = vmatpush1.msra.mxu0 0.0
    %687 = vmatprep.subr.mxu0 0.0
    %688 = vmatpush1.msra.mxu0 0.0
    %689 = vmatprep.subr.mxu0 0.0
    %690 = vmatpush1.msra.mxu0 0.0
    %691 = vmatprep.subr.mxu0 0.0
    %692 = vmatpush1.msra.mxu0 0.0
    %693 = vmatprep.subr.mxu0 0.0
    %694 = vmatpush1.msra.mxu0 0.0
    %695 = vmatprep.mubr.f32.mxu0 0.0
    %696 = vmatmul.mubr.f32.gmra.mrb[0].mxu0 %v55
    %v697 = vpop.f32.mrb[0].mxu0
    %v698 = vadd.f32 0.0, %v697
    %v699 = vpop.f32.mrb[0].mxu0
    %700 = vdwg.mxu0
    %v701 = vmul.f32 %v698, %v54
    %vm702 = vcmp.gt.f32.partialorder %v701, %v576
    %v703 = vsel %vm702, %v701, %v576
    %v704 = vsel %vm702, %v578, %v577
    %v705 = vld [vmem:[%s3 + $0x5] sm:$0x1]
    %v706 = vlaneseq
    %v707 = vshrl.u32 %v706, 7
    %v708 = vsub.s32 0, %v707
    %v709 = vrot.slane %v705, %v708
    %vm710 = vcmp.eq.s32.totalorder %v57, %v709
    %vm711 = vcmp.eq.s32.totalorder %v58, %v709
    %vm712 = vcmp.eq.s32.totalorder %v59, %v709
    %vm713 = vcmp.eq.s32.totalorder %v60, %v709
    %vm714 = vcmp.eq.s32.totalorder %v61, %v709
    %vm715 = vcmp.eq.s32.totalorder %v62, %v709
    %vm716 = vcmp.eq.s32.totalorder %v63, %v709
    %vm717 = vcmp.eq.s32.totalorder %v64, %v709
    %vm718 = vcmp.eq.s32.totalorder %v65, %v709
    %vm719 = vcmp.eq.s32.totalorder %v66, %v709
    %vm720 = vcmp.eq.s32.totalorder %v67, %v709
    %vm721 = vcmp.eq.s32.totalorder %v68, %v709
    %vm722 = vcmp.eq.s32.totalorder %v69, %v709
    %vm723 = vcmp.eq.s32.totalorder %v70, %v709
    %vm724 = vcmp.eq.s32.totalorder %v71, %v709
    %vm725 = vcmp.eq.s32.totalorder %v72, %v709
    %v726 = vsel %vm710, 1, 0
    %v727 = vsel %vm711, 1, 0
    %v728 = vsel %vm712, 1, 0
    %v729 = vsel %vm713, 1, 0
    %v730 = vsel %vm714, 1, 0
    %v731 = vsel %vm715, 1, 0
    %v732 = vsel %vm716, 1, 0
    %v733 = vsel %vm717, 1, 0
    %v734 = vsel %vm718, 1, 0
    %v735 = vsel %vm719, 1, 0
    %v736 = vsel %vm720, 1, 0
    %v737 = vsel %vm721, 1, 0
    %v738 = vsel %vm722, 1, 0
    %v739 = vsel %vm723, 1, 0
    %v740 = vsel %vm724, 1, 0
    %v741 = vsel %vm725, 1, 0
    %v742 = vcvt.s32.f32 %v726
    %v743 = vcvt.s32.f32 %v727
    %v744 = vcvt.s32.f32 %v728
    %v745 = vcvt.s32.f32 %v729
    %v746 = vcvt.s32.f32 %v730
    %v747 = vcvt.s32.f32 %v731
    %v748 = vcvt.s32.f32 %v732
    %v749 = vcvt.s32.f32 %v733
    %v750 = vcvt.s32.f32 %v734
    %v751 = vcvt.s32.f32 %v735
    %v752 = vcvt.s32.f32 %v736
    %v753 = vcvt.s32.f32 %v737
    %v754 = vcvt.s32.f32 %v738
    %v755 = vcvt.s32.f32 %v739
    %v756 = vcvt.s32.f32 %v740
    %v757 = vcvt.s32.f32 %v741
    %758 = vmatprep.subr.mxu0 0.0
    %759 = vmatpush1.msra.mxu0 %v742
    %760 = vmatprep.subr.mxu0 0.0
    %761 = vmatpush1.msra.mxu0 %v743
    %762 = vmatprep.subr.mxu0 0.0
    %763 = vmatpush1.msra.mxu0 %v744
    %764 = vmatprep.subr.mxu0 0.0
    %765 = vmatpush1.msra.mxu0 %v745
    %766 = vmatprep.subr.mxu0 0.0
    %767 = vmatpush1.msra.mxu0 %v746
    %768 = vmatprep.subr.mxu0 0.0
    %769 = vmatpush1.msra.mxu0 %v747
    %770 = vmatprep.subr.mxu0 0.0
    %771 = vmatpush1.msra.mxu0 %v748
    %772 = vmatprep.subr.mxu0 0.0
    %773 = vmatpush1.msra.mxu0 %v749
    %774 = vmatprep.subr.mxu0 0.0
    %775 = vmatpush1.msra.mxu0 %v750
    %776 = vmatprep.subr.mxu0 0.0
    %777 = vmatpush1.msra.mxu0 %v751
    %778 = vmatprep.subr.mxu0 0.0
    %779 = vmatpush1.msra.mxu0 %v752
    %780 = vmatprep.subr.mxu0 0.0
    %781 = vmatpush1.msra.mxu0 %v753
    %782 = vmatprep.subr.mxu0 0.0
    %783 = vmatpush1.msra.mxu0 %v754
    %784 = vmatprep.subr.mxu0 0.0
    %785 = vmatpush1.msra.mxu0 %v755
    %786 = vmatprep.subr.mxu0 0.0
    %787 = vmatpush1.msra.mxu0 %v756
    %788 = vmatprep.subr.mxu0 0.0
    %789 = vmatpush1.msra.mxu0 %v757
    %790 = vmatprep.subr.mxu0 0.0
    %791 = vmatpush1.msra.mxu0 0.0
    %792 = vmatprep.subr.mxu0 0.0
    %793 = vmatpush1.msra.mxu0 0.0
    %794 = vmatprep.subr.mxu0 0.0
    %795 = vmatpush1.msra.mxu0 0.0
    %796 = vmatprep.subr.mxu0 0.0
    %797 = vmatpush1.msra.mxu0 0.0
    %798 = vmatprep.subr.mxu0 0.0
    %799 = vmatpush1.msra.mxu0 0.0
    %800 = vmatprep.subr.mxu0 0.0
    %801 = vmatpush1.msra.mxu0 0.0
    %802 = vmatprep.subr.mxu0 0.0
    %803 = vmatpush1.msra.mxu0 0.0
    %804 = vmatprep.subr.mxu0 0.0
    %805 = vmatpush1.msra.mxu0 0.0
    %806 = vmatprep.subr.mxu0 0.0
    %807 = vmatpush1.msra.mxu0 0.0
    %808 = vmatprep.subr.mxu0 0.0
    %809 = vmatpush1.msra.mxu0 0.0
    %810 = vmatprep.subr.mxu0 0.0
    %811 = vmatpush1.msra.mxu0 0.0
    %812 = vmatprep.subr.mxu0 0.0
    %813 = vmatpush1.msra.mxu0 0.0
    %814 = vmatprep.subr.mxu0 0.0
    %815 = vmatpush1.msra.mxu0 0.0
    %816 = vmatprep.subr.mxu0 0.0
    %817 = vmatpush1.msra.mxu0 0.0
    %818 = vmatprep.subr.mxu0 0.0
    %819 = vmatpush1.msra.mxu0 0.0
    %820 = vmatprep.subr.mxu0 0.0
    %821 = vmatpush1.msra.mxu0 0.0
    %822 = vmatprep.mubr.f32.mxu0 0.0
    %823 = vmatmul.mubr.f32.gmra.mrb[0].mxu0 %v55
    %v824 = vpop.f32.mrb[0].mxu0
    %v825 = vadd.f32 0.0, %v824
    %v826 = vpop.f32.mrb[0].mxu0
    %827 = vdwg.mxu0
    %v828 = vmul.f32 %v825, %v54
    %vm829 = vcmp.gt.f32.partialorder %v828, %v703
    %v830 = vsel %vm829, %v828, %v703
    %v831 = vsel %vm829, %v705, %v704
    %v832 = vld [vmem:[%s3 + $0x6] sm:$0x1]
    %v833 = vlaneseq
    %v834 = vshrl.u32 %v833, 7
    %v835 = vsub.s32 0, %v834
    %v836 = vrot.slane %v832, %v835
    %vm837 = vcmp.eq.s32.totalorder %v57, %v836
    %vm838 = vcmp.eq.s32.totalorder %v58, %v836
    %vm839 = vcmp.eq.s32.totalorder %v59, %v836
    %vm840 = vcmp.eq.s32.totalorder %v60, %v836
    %vm841 = vcmp.eq.s32.totalorder %v61, %v836
    %vm842 = vcmp.eq.s32.totalorder %v62, %v836
    %vm843 = vcmp.eq.s32.totalorder %v63, %v836
    %vm844 = vcmp.eq.s32.totalorder %v64, %v836
    %vm845 = vcmp.eq.s32.totalorder %v65, %v836
    %vm846 = vcmp.eq.s32.totalorder %v66, %v836
    %vm847 = vcmp.eq.s32.totalorder %v67, %v836
    %vm848 = vcmp.eq.s32.totalorder %v68, %v836
    %vm849 = vcmp.eq.s32.totalorder %v69, %v836
    %vm850 = vcmp.eq.s32.totalorder %v70, %v836
    %vm851 = vcmp.eq.s32.totalorder %v71, %v836
    %vm852 = vcmp.eq.s32.totalorder %v72, %v836
    %v853 = vsel %vm837, 1, 0
    %v854 = vsel %vm838, 1, 0
    %v855 = vsel %vm839, 1, 0
    %v856 = vsel %vm840, 1, 0
    %v857 = vsel %vm841, 1, 0
    %v858 = vsel %vm842, 1, 0
    %v859 = vsel %vm843, 1, 0
    %v860 = vsel %vm844, 1, 0
    %v861 = vsel %vm845, 1, 0
    %v862 = vsel %vm846, 1, 0
    %v863 = vsel %vm847, 1, 0
    %v864 = vsel %vm848, 1, 0
    %v865 = vsel %vm849, 1, 0
    %v866 = vsel %vm850, 1, 0
    %v867 = vsel %vm851, 1, 0
    %v868 = vsel %vm852, 1, 0
    %v869 = vcvt.s32.f32 %v853
    %v870 = vcvt.s32.f32 %v854
    %v871 = vcvt.s32.f32 %v855
    %v872 = vcvt.s32.f32 %v856
    %v873 = vcvt.s32.f32 %v857
    %v874 = vcvt.s32.f32 %v858
    %v875 = vcvt.s32.f32 %v859
    %v876 = vcvt.s32.f32 %v860
    %v877 = vcvt.s32.f32 %v861
    %v878 = vcvt.s32.f32 %v862
    %v879 = vcvt.s32.f32 %v863
    %v880 = vcvt.s32.f32 %v864
    %v881 = vcvt.s32.f32 %v865
    %v882 = vcvt.s32.f32 %v866
    %v883 = vcvt.s32.f32 %v867
    %v884 = vcvt.s32.f32 %v868
    %885 = vmatprep.subr.mxu0 0.0
    %886 = vmatpush1.msra.mxu0 %v869
    %887 = vmatprep.subr.mxu0 0.0
    %888 = vmatpush1.msra.mxu0 %v870
    %889 = vmatprep.subr.mxu0 0.0
    %890 = vmatpush1.msra.mxu0 %v871
    %891 = vmatprep.subr.mxu0 0.0
    %892 = vmatpush1.msra.mxu0 %v872
    %893 = vmatprep.subr.mxu0 0.0
    %894 = vmatpush1.msra.mxu0 %v873
    %895 = vmatprep.subr.mxu0 0.0
    %896 = vmatpush1.msra.mxu0 %v874
    %897 = vmatprep.subr.mxu0 0.0
    %898 = vmatpush1.msra.mxu0 %v875
    %899 = vmatprep.subr.mxu0 0.0
    %900 = vmatpush1.msra.mxu0 %v876
    %901 = vmatprep.subr.mxu0 0.0
    %902 = vmatpush1.msra.mxu0 %v877
    %903 = vmatprep.subr.mxu0 0.0
    %904 = vmatpush1.msra.mxu0 %v878
    %905 = vmatprep.subr.mxu0 0.0
    %906 = vmatpush1.msra.mxu0 %v879
    %907 = vmatprep.subr.mxu0 0.0
    %908 = vmatpush1.msra.mxu0 %v880
    %909 = vmatprep.subr.mxu0 0.0
    %910 = vmatpush1.msra.mxu0 %v881
    %911 = vmatprep.subr.mxu0 0.0
    %912 = vmatpush1.msra.mxu0 %v882
    %913 = vmatprep.subr.mxu0 0.0
    %914 = vmatpush1.msra.mxu0 %v883
    %915 = vmatprep.subr.mxu0 0.0
    %916 = vmatpush1.msra.mxu0 %v884
    %917 = vmatprep.subr.mxu0 0.0
    %918 = vmatpush1.msra.mxu0 0.0
    %919 = vmatprep.subr.mxu0 0.0
    %920 = vmatpush1.msra.mxu0 0.0
    %921 = vmatprep.subr.mxu0 0.0
    %922 = vmatpush1.msra.mxu0 0.0
    %923 = vmatprep.subr.mxu0 0.0
    %924 = vmatpush1.msra.mxu0 0.0
    %925 = vmatprep.subr.mxu0 0.0
    %926 = vmatpush1.msra.mxu0 0.0
    %927 = vmatprep.subr.mxu0 0.0
    %928 = vmatpush1.msra.mxu0 0.0
    %929 = vmatprep.subr.mxu0 0.0
    %930 = vmatpush1.msra.mxu0 0.0
    %931 = vmatprep.subr.mxu0 0.0
    %932 = vmatpush1.msra.mxu0 0.0
    %933 = vmatprep.subr.mxu0 0.0
    %934 = vmatpush1.msra.mxu0 0.0
    %935 = vmatprep.subr.mxu0 0.0
    %936 = vmatpush1.msra.mxu0 0.0
    %937 = vmatprep.subr.mxu0 0.0
    %938 = vmatpush1.msra.mxu0 0.0
    %939 = vmatprep.subr.mxu0 0.0
    %940 = vmatpush1.msra.mxu0 0.0
    %941 = vmatprep.subr.mxu0 0.0
    %942 = vmatpush1.msra.mxu0 0.0
    %943 = vmatprep.subr.mxu0 0.0
    %944 = vmatpush1.msra.mxu0 0.0
    %945 = vmatprep.subr.mxu0 0.0
    %946 = vmatpush1.msra.mxu0 0.0
    %947 = vmatprep.subr.mxu0 0.0
    %948 = vmatpush1.msra.mxu0 0.0
    %949 = vmatprep.mubr.f32.mxu0 0.0
    %950 = vmatmul.mubr.f32.gmra.mrb[0].mxu0 %v55
    %v951 = vpop.f32.mrb[0].mxu0
    %v952 = vadd.f32 0.0, %v951
    %v953 = vpop.f32.mrb[0].mxu0
    %954 = vdwg.mxu0
    %v955 = vmul.f32 %v952, %v54
    %vm956 = vcmp.gt.f32.partialorder %v955, %v830
    %v957 = vsel %vm956, %v955, %v830
    %v958 = vsel %vm956, %v832, %v831
    %v959 = vld [vmem:[%s3 + $0x7] sm:$0x1]
    %v960 = vlaneseq
    %v961 = vshrl.u32 %v960, 7
    %v962 = vsub.s32 0, %v961
    %v963 = vrot.slane %v959, %v962
    %vm964 = vcmp.eq.s32.totalorder %v57, %v963
    %vm965 = vcmp.eq.s32.totalorder %v58, %v963
    %vm966 = vcmp.eq.s32.totalorder %v59, %v963
    %vm967 = vcmp.eq.s32.totalorder %v60, %v963
    %vm968 = vcmp.eq.s32.totalorder %v61, %v963
    %vm969 = vcmp.eq.s32.totalorder %v62, %v963
    %vm970 = vcmp.eq.s32.totalorder %v63, %v963
    %vm971 = vcmp.eq.s32.totalorder %v64, %v963
    %vm972 = vcmp.eq.s32.totalorder %v65, %v963
    %vm973 = vcmp.eq.s32.totalorder %v66, %v963
    %vm974 = vcmp.eq.s32.totalorder %v67, %v963
    %vm975 = vcmp.eq.s32.totalorder %v68, %v963
    %vm976 = vcmp.eq.s32.totalorder %v69, %v963
    %vm977 = vcmp.eq.s32.totalorder %v70, %v963
    %vm978 = vcmp.eq.s32.totalorder %v71, %v963
    %vm979 = vcmp.eq.s32.totalorder %v72, %v963
    %v980 = vsel %vm964, 1, 0
    %v981 = vsel %vm965, 1, 0
    %v982 = vsel %vm966, 1, 0
    %v983 = vsel %vm967, 1, 0
    %v984 = vsel %vm968, 1, 0
    %v985 = vsel %vm969, 1, 0
    %v986 = vsel %vm970, 1, 0
    %v987 = vsel %vm971, 1, 0
    %v988 = vsel %vm972, 1, 0
    %v989 = vsel %vm973, 1, 0
    %v990 = vsel %vm974, 1, 0
    %v991 = vsel %vm975, 1, 0
    %v992 = vsel %vm976, 1, 0
    %v993 = vsel %vm977, 1, 0
    %v994 = vsel %vm978, 1, 0
    %v995 = vsel %vm979, 1, 0
    %v996 = vcvt.s32.f32 %v980
    %v997 = vcvt.s32.f32 %v981
    %v998 = vcvt.s32.f32 %v982
    %v999 = vcvt.s32.f32 %v983
    %v1000 = vcvt.s32.f32 %v984
    %v1001 = vcvt.s32.f32 %v985
    %v1002 = vcvt.s32.f32 %v986
    %v1003 = vcvt.s32.f32 %v987
    %v1004 = vcvt.s32.f32 %v988
    %v1005 = vcvt.s32.f32 %v989
    %v1006 = vcvt.s32.f32 %v990
    %v1007 = vcvt.s32.f32 %v991
    %v1008 = vcvt.s32.f32 %v992
    %v1009 = vcvt.s32.f32 %v993
    %v1010 = vcvt.s32.f32 %v994
    %v1011 = vcvt.s32.f32 %v995
    %1012 = vmatprep.subr.mxu0 0.0
    %1013 = vmatpush1.msra.mxu0 %v996
    %1014 = vmatprep.subr.mxu0 0.0
    %1015 = vmatpush1.msra.mxu0 %v997
    %1016 = vmatprep.subr.mxu0 0.0
    %1017 = vmatpush1.msra.mxu0 %v998
    %1018 = vmatprep.subr.mxu0 0.0
    %1019 = vmatpush1.msra.mxu0 %v999
    %1020 = vmatprep.subr.mxu0 0.0
    %1021 = vmatpush1.msra.mxu0 %v1000
    %1022 = vmatprep.subr.mxu0 0.0
    %1023 = vmatpush1.msra.mxu0 %v1001
    %1024 = vmatprep.subr.mxu0 0.0
    %1025 = vmatpush1.msra.mxu0 %v1002
    %1026 = vmatprep.subr.mxu0 0.0
    %1027 = vmatpush1.msra.mxu0 %v1003
    %1028 = vmatprep.subr.mxu0 0.0
    %1029 = vmatpush1.msra.mxu0 %v1004
    %1030 = vmatprep.subr.mxu0 0.0
    %1031 = vmatpush1.msra.mxu0 %v1005
    %1032 = vmatprep.subr.mxu0 0.0
    %1033 = vmatpush1.msra.mxu0 %v1006
    %1034 = vmatprep.subr.mxu0 0.0
    %1035 = vmatpush1.msra.mxu0 %v1007
    %1036 = vmatprep.subr.mxu0 0.0
    %1037 = vmatpush1.msra.mxu0 %v1008
    %1038 = vmatprep.subr.mxu0 0.0
    %1039 = vmatpush1.msra.mxu0 %v1009
    %1040 = vmatprep.subr.mxu0 0.0
    %1041 = vmatpush1.msra.mxu0 %v1010
    %1042 = vmatprep.subr.mxu0 0.0
    %1043 = vmatpush1.msra.mxu0 %v1011
    %1044 = vmatprep.subr.mxu0 0.0
    %1045 = vmatpush1.msra.mxu0 0.0
    %1046 = vmatprep.subr.mxu0 0.0
    %1047 = vmatpush1.msra.mxu0 0.0
    %1048 = vmatprep.subr.mxu0 0.0
    %1049 = vmatpush1.msra.mxu0 0.0
    %1050 = vmatprep.subr.mxu0 0.0
    %1051 = vmatpush1.msra.mxu0 0.0
    %1052 = vmatprep.subr.mxu0 0.0
    %1053 = vmatpush1.msra.mxu0 0.0
    %1054 = vmatprep.subr.mxu0 0.0
    %1055 = vmatpush1.msra.mxu0 0.0
    %1056 = vmatprep.subr.mxu0 0.0
    %1057 = vmatpush1.msra.mxu0 0.0
    %1058 = vmatprep.subr.mxu0 0.0
    %1059 = vmatpush1.msra.mxu0 0.0
    %1060 = vmatprep.subr.mxu0 0.0
    %1061 = vmatpush1.msra.mxu0 0.0
    %1062 = vmatprep.subr.mxu0 0.0
    %1063 = vmatpush1.msra.mxu0 0.0
    %1064 = vmatprep.subr.mxu0 0.0
    %1065 = vmatpush1.msra.mxu0 0.0
    %1066 = vmatprep.subr.mxu0 0.0
    %1067 = vmatpush1.msra.mxu0 0.0
    %1068 = vmatprep.subr.mxu0 0.0
    %1069 = vmatpush1.msra.mxu0 0.0
    %1070 = vmatprep.subr.mxu0 0.0
    %1071 = vmatpush1.msra.mxu0 0.0
    %1072 = vmatprep.subr.mxu0 0.0
    %1073 = vmatpush1.msra.mxu0 0.0
    %1074 = vmatprep.subr.mxu0 0.0
    %1075 = vmatpush1.msra.mxu0 0.0
    %1076 = vmatprep.mubr.f32.mxu0 0.0
    %1077 = vmatmul.mubr.f32.gmra.mrb[0].mxu0 %v55
    %v1078 = vpop.f32.mrb[0].mxu0
    %v1079 = vadd.f32 0.0, %v1078
    %v1080 = vpop.f32.mrb[0].mxu0
    %1081 = vdwg.mxu0
    %v1082 = vmul.f32 %v1079, %v54
    %vm1083 = vcmp.gt.f32.partialorder %v1082, %v957
    %v1084 = vsel %vm1083, %v1082, %v957
    %v1085 = vsel %vm1083, %v959, %v958
    %vm1086 = vcmask 122880
    %1087 = vst.msk [vmem:[#allocation7] sm:$0x1] %vm1086, %v1084
    %1088 = vst.msk [vmem:[#allocation8] sm:$0x1] %vm1086, %v1085
    // Predicated region
    $region26: #{tpu_custom_call.1} parent=1 // pred_check
      _
    $region27: #{tpu_custom_call.1} parent=1 // pred_check_branch
      %1090 = sbr.rel (0) target = $region29
    $region28: #{tpu_custom_call.1} parent=1 // pred_region
      %s1092 = ssub.s32 16, 16
      %1093 = vsyncadd [#allocation4], %s1092
      %s1095 = sshll.u32 [#allocation7], 4
      %s1096 = int_to_ptr.vmem [resolvable:$true] %s1095
      %1098 = dma.vmem_to_hbm [thread:$0]  %s1096, 16, %s4, [#allocation4]
    $region29: #{tpu_custom_call.1} parent=1 // pred_fallthru
      _
    // Predicated region
    $region30: #{tpu_custom_call.1} parent=1 // pred_check
      _
    $region31: #{tpu_custom_call.1} parent=1 // pred_check_branch
      %1100 = sbr.rel (0) target = $region33
    $region32: #{tpu_custom_call.1} parent=1 // pred_region
      %s1102 = ssub.s32 16, 16
      %1103 = vsyncadd [#allocation9], %s1102
      %s1105 = sshll.u32 [#allocation8], 4
      %s1106 = int_to_ptr.vmem [resolvable:$true] %s1105
      %1108 = dma.vmem_to_hbm [thread:$0]  %s1106, 16, %s5, [#allocation9]
    $region33: #{tpu_custom_call.1} parent=1 // pred_fallthru
      _
    // Predicated region
    $region34: #{tpu_custom_call.1} parent=1 // pred_check
      _
    $region35: #{tpu_custom_call.1} parent=1 // pred_check_branch
      %1110 = sbr.rel (0) target = $region37
    $region36: #{tpu_custom_call.1} parent=1 // pred_region
      %1111 = dma.done [#allocation4], 16
    $region37: #{tpu_custom_call.1} parent=1 // pred_fallthru
      _
    // Predicated region
    $region38: #{tpu_custom_call.1} parent=1 // pred_check
      _
    $region39: #{tpu_custom_call.1} parent=1 // pred_check_branch
      %1113 = sbr.rel (0) target = $region41
    $region40: #{tpu_custom_call.1} parent=1 // pred_region
      %1114 = dma.done [#allocation9], 16
    $region41: #{tpu_custom_call.1} parent=1 // pred_fallthru
      _
    %1115 = vsyncpa [#allocation3], 1
    %1116 = vsyncpa [#allocation4], 1
    %1117 = vsyncpa [#allocation9], 1
    %1118 = vsyncpa [#allocation5], 1

</llo_original>
